<compile_context>
chip_gen: v7x
topology: tpu7x:2x2x1
jax: 0.10.0
libtpu: 0.0.40
codegen_flags: <defaults>
</compile_context>

<pallas_src>
import jax
import jax.numpy as jnp
from jax.experimental import pallas as pl
from jax.experimental.pallas import tpu as pltpu

# synthetic cfg.MODEL.* values
NUM_BRANCH = 2       # len(cfg.MODEL.BRANCH), no 'part' branch
FEAT_DIM = 64        # cfg.MODEL.BACKBONE.FEAT_DIM
EMBEDDING_DIM = 32   # cfg.MODEL.HEADS.EMBEDDING_DIM
NUM_CLASSES = 16     # cfg.MODEL.HEADS.NUM_CLASSES
BN_EPS = 1e-5


def multihead_kernel(f_ref, we_ref, gamma_ref, beta_ref, wc_ref, cls_ref, feat_ref):
    """One branch of the MultiHead training forward (grid axis = branch).

    f_ref:     (N, C, HW)  this branch's NCHW feature map (spatial flattened), bf16
    we_ref:    (E, C)      1x1 conv weight (bias=False), bf16
    gamma_ref: (1, E)      BN weight, f32
    beta_ref:  (1, E)      BN bias (frozen at 0 by its init, kept general), f32
    wc_ref:    (K, E)      classifier weight (bias=False), bf16
    cls_ref:   (N, K)      this branch's cls_outputs, f32
    feat_ref:  (N, C)      this branch's pooled global feature, f32
    """
    inv_hw = 1.0 / f_ref.shape[-1]

    # Global average pool == lane reduction over HW (NCHW-flat, no transpose),
    # accumulated in f32.  (At production HW sizes this would be a tiled
    # partial-sum into a VMEM scratch instead of a whole-block upcast.)
    pooled = jnp.sum(f_ref[...].astype(jnp.float32), axis=-1) * inv_hw       # (N, C)
    feat_ref[...] = pooled.astype(feat_ref.dtype)

    # 1x1 conv (bias=False) on a 1x1 spatial map == pooled @ We^T.
    # Contract the weight's last axis directly (no transposed weight copy);
    # bf16 operands on the MXU, f32 accumulation.
    emb = jax.lax.dot_general(
        pooled.astype(jnp.bfloat16), we_ref[...],
        dimension_numbers=(((1,), (1,)), ((), ())),
        preferred_element_type=jnp.float32)                                   # (N, E)

    # BatchNorm in training mode: biased batch statistics over the batch dim,
    # affine gamma, bias frozen at 0 by init (kept general).
    # NOTE: N is never tiled across the grid, so these are true batch stats.
    mu = jnp.mean(emb, axis=0, keepdims=True)
    var = jnp.mean(jnp.square(emb - mu), axis=0, keepdims=True)
    bn = (emb - mu) * jax.lax.rsqrt(var + BN_EPS) * gamma_ref[...] + beta_ref[...]

    # Linear classifier (bias=False): bn @ Wc^T.
    logits = jax.lax.dot_general(
        bn.astype(jnp.bfloat16), wc_ref[...],
        dimension_numbers=(((1,), (1,)), ((), ())),
        preferred_element_type=jnp.float32)                                   # (N, K)
    cls_ref[...] = logits.astype(cls_ref.dtype)


@jax.jit
def multihead_forward(features_nchw, conv_w, bn_gamma, bn_beta, cls_w):
    """
    features_nchw: (B, N, C, H, W)  stacked per-branch NCHW feature maps
                   (bf16 recommended: halves HBM->VMEM traffic)
    conv_w:        (B, E, C)        Conv2d(C, E, 1, bias=False) weights (1x1 squeezed)
    bn_gamma/beta: (B, E)           BN affine params (f32)
    cls_w:         (B, K, E)        Linear(E, K, bias=False) weights
    """
    B, N, C, H, W = features_nchw.shape
    E = conv_w.shape[1]
    K = cls_w.shape[1]
    HW = H * W

    # NCHW-flat: merging trailing contiguous dims is free (no HBM transpose pass).
    f = features_nchw.reshape(B, N, C, HW)
    gamma = bn_gamma.reshape(B, 1, E)
    beta = bn_beta.reshape(B, 1, E)

    cost = pl.CostEstimate(
        flops=2 * B * N * (C * E + E * K) + B * N * C * HW,
        transcendentals=B * E,
        bytes_accessed=(f.size * f.dtype.itemsize
                        + conv_w.size * conv_w.dtype.itemsize
                        + cls_w.size * cls_w.dtype.itemsize
                        + gamma.size * gamma.dtype.itemsize
                        + beta.size * beta.dtype.itemsize
                        + B * N * K * 4 + B * N * C * 4))

    cls_out, feat_bnc = pl.pallas_call(
        multihead_kernel,
        out_shape=(
            jax.ShapeDtypeStruct((B, N, K), jnp.float32),   # per-branch cls_outputs
            jax.ShapeDtypeStruct((B, N, C), jnp.float32),   # per-branch pooled global feats
        ),
        grid=(B,),
        in_specs=[
            # per-branch blocks (leading branch dim squeezed) -> double-buffered DMA
            pl.BlockSpec((None, N, C, HW), lambda b: (b, 0, 0, 0)),
            pl.BlockSpec((None, E, C), lambda b: (b, 0, 0)),
            pl.BlockSpec((None, 1, E), lambda b: (b, 0, 0)),
            pl.BlockSpec((None, 1, E), lambda b: (b, 0, 0)),
            pl.BlockSpec((None, K, E), lambda b: (b, 0, 0)),
        ],
        out_specs=(
            pl.BlockSpec((None, N, K), lambda b: (b, 0, 0)),
            pl.BlockSpec((None, N, C), lambda b: (b, 0, 0)),
        ),
        compiler_params=pltpu.CompilerParams(dimension_semantics=("parallel",)),
        cost_estimate=cost,
    )(f, conv_w, gamma, beta, cls_w)

    # pred_class_logits = sum over branches of F.linear(bn_feat[b], classifier[b].weight):
    # a (B, N, K) -> (N, K) add over 2 branches, fused by XLA for free.
    pred_logits = cls_out.sum(axis=0)

    # neck_feat='before': concat of pooled global feats along channels.
    # (B,N,C) -> (N,B,C) -> (N, B*C): one tiny (~2 KiB) transpose HLO.
    feat = jnp.transpose(feat_bnc, (1, 0, 2)).reshape(N, B * C)

    return {
        'cls_outputs': [cls_out[b] for b in range(B)],
        'pred_class_logits': pred_logits,
        'features': feat,
    }


def _reference(features_nchw, conv_w, bn_gamma, bn_beta, cls_w):
    """Pure-JAX reference mirroring the PyTorch training-mode forward (f32, HIGHEST)."""
    x = features_nchw.astype(jnp.float32)
    w1 = conv_w.astype(jnp.float32)
    w2 = cls_w.astype(jnp.float32)
    pooled = x.mean(axis=(3, 4))                                      # (B, N, C)
    emb = jnp.einsum('bnc,bec->bne', pooled, w1,
                     precision=jax.lax.Precision.HIGHEST)             # (B, N, E)
    mu = emb.mean(axis=1, keepdims=True)
    var = jnp.square(emb - mu).mean(axis=1, keepdims=True)
    bn = (emb - mu) / jnp.sqrt(var + BN_EPS) * bn_gamma[:, None, :] + bn_beta[:, None, :]
    logits = jnp.einsum('bne,bke->bnk', bn, w2,
                        precision=jax.lax.Precision.HIGHEST)          # (B, N, K)
    feat = jnp.transpose(pooled, (1, 0, 2)).reshape(pooled.shape[1], -1)   # (N, B*C)
    return logits, logits.sum(axis=0), feat


if __name__ == "__main__":
    key = jax.random.PRNGKey(0)
    k1, k2, k3 = jax.random.split(key, 3)

    B, N, C, H, W = NUM_BRANCH, 4, FEAT_DIM, 8, 8
    E, K = EMBEDDING_DIM, NUM_CLASSES

    # bf16 feature maps & matmul weights: halves HBM->VMEM traffic and feeds the
    # MXU single-pass bf16 operands.  Casts happen once here, outside the jitted
    # hot path; in-kernel accumulation remains f32.  (Deliberate ~1e-3-relative
    # precision loss vs the f32 PyTorch module.)
    features = jax.random.normal(k1, (B, N, C, H, W), jnp.float32).astype(jnp.bfloat16)

    # deterministic parameter init (shapes from __init__):
    #  - Conv2d(C, E, 1, bias=False): kaiming-style scale
    #  - BN (bias_freeze): weight=1, bias=0 (weights_init_kaiming)
    #  - Linear(E, K, bias=False): std=0.001 (weights_init_classifier)
    conv_w = (jax.random.normal(k2, (B, E, C), jnp.float32)
              * (2.0 / C) ** 0.5).astype(jnp.bfloat16)
    bn_gamma = jnp.ones((B, E), jnp.float32)
    bn_beta = jnp.zeros((B, E), jnp.float32)
    cls_w = (jax.random.normal(k3, (B, K, E), jnp.float32) * 0.001).astype(jnp.bfloat16)

    out = multihead_forward(features, conv_w, bn_gamma, bn_beta, cls_w)
    jax.block_until_ready(out)

    # sanity check against the pure-JAX reference (same bf16 inputs, f32 math)
    logits_r, pred_r, feat_r = _reference(features, conv_w, bn_gamma, bn_beta, cls_w)
    assert jnp.allclose(out['features'], feat_r, atol=2e-4, rtol=1e-3)
    assert jnp.allclose(out['pred_class_logits'], pred_r, atol=5e-4, rtol=1e-2)
    for b in range(B):
        assert jnp.allclose(out['cls_outputs'][b], logits_r[b], atol=5e-4, rtol=1e-2)

    print("KERNEL_OK")
</pallas_src>

<mosaic_0001>
module attributes {stable_mosaic.version = 11 : i64} {
  func.func @multihead_kernel(%arg0: i32, %arg1: memref<1x4x64x64xbf16, #tpu.memory_space<vmem>>, %arg2: memref<1x32x64xbf16, #tpu.memory_space<vmem>>, %arg3: memref<1x1x32xf32, #tpu.memory_space<vmem>>, %arg4: memref<1x1x32xf32, #tpu.memory_space<vmem>>, %arg5: memref<1x16x32xbf16, #tpu.memory_space<vmem>>, %arg6: memref<1x4x16xf32, #tpu.memory_space<vmem>>, %arg7: memref<1x4x64xf32, #tpu.memory_space<vmem>>) attributes {dimension_semantics = [#tpu.dimension_semantics<parallel>], iteration_bounds = array<i64: 2>, scalar_prefetch = 0 : i64, scratch_operands = 0 : i64, tpu.core_type = #tpu.core_type<tc>, window_params = [{transform_indices = @transform_0, window_bounds = array<i64: 1, 4, 64, 64>}, {transform_indices = @transform_1, window_bounds = array<i64: 1, 32, 64>}, {transform_indices = @transform_2, window_bounds = array<i64: 1, 1, 32>}, {transform_indices = @transform_3, window_bounds = array<i64: 1, 1, 32>}, {transform_indices = @transform_4, window_bounds = array<i64: 1, 16, 32>}, {transform_indices = @transform_5, window_bounds = array<i64: 1, 4, 16>}, {transform_indices = @transform_6, window_bounds = array<i64: 1, 4, 64>}]} {
    %c0 = arith.constant 0 : index
    %c0_0 = arith.constant 0 : index
    %c0_1 = arith.constant 0 : index
    %c0_2 = arith.constant 0 : index
    %0 = vector.load %arg1[%c0, %c0_0, %c0_1, %c0_2] : memref<1x4x64x64xbf16, #tpu.memory_space<vmem>>, vector<1x4x64x64xbf16>
    %1 = vector.shape_cast %0 : vector<1x4x64x64xbf16> to vector<4x64x64xbf16>
    %2 = arith.extf %1 : vector<4x64x64xbf16> to vector<4x64x64xf32>
    %cst = arith.constant dense<0.000000e+00> : vector<4x64xf32>
    %3 = vector.multi_reduction <add>, %2, %cst [2] : vector<4x64x64xf32> to vector<4x64xf32>
    %cst_3 = arith.constant 1.562500e-02 : f32
    %4 = vector.broadcast %cst_3 : f32 to vector<4x64xf32>
    %5 = arith.mulf %3, %4 : vector<4x64xf32>
    %c0_4 = arith.constant 0 : index
    %c0_5 = arith.constant 0 : index
    %c0_6 = arith.constant 0 : index
    %6 = vector.load %arg7[%c0_4, %c0_5, %c0_6] : memref<1x4x64xf32, #tpu.memory_space<vmem>>, vector<1x4x64xf32>
    %7 = vector.shape_cast %6 : vector<1x4x64xf32> to vector<4x64xf32>
    %8 = vector.shape_cast %5 : vector<4x64xf32> to vector<1x4x64xf32>
    tpu.vector_store %arg7[%c0_4, %c0_5, %c0_6], %8 {strides = array<i32>} : memref<1x4x64xf32, #tpu.memory_space<vmem>>, vector<1x4x64xf32>,
    %9 = arith.truncf %5 : vector<4x64xf32> to vector<4x64xbf16>
    %c0_7 = arith.constant 0 : index
    %c0_8 = arith.constant 0 : index
    %c0_9 = arith.constant 0 : index
    %10 = vector.load %arg2[%c0_7, %c0_8, %c0_9] : memref<1x32x64xbf16, #tpu.memory_space<vmem>>, vector<1x32x64xbf16>
    %11 = vector.shape_cast %10 : vector<1x32x64xbf16> to vector<32x64xbf16>
    %cst_10 = arith.constant dense<0.000000e+00> : vector<4x32xf32>
    %12 = tpu.matmul %9, %11, %cst_10 {dimension_numbers = #tpu.dot_dimension_numbers<[1], [1], [0], [0], [0, 0, 1, 0], [], []>} : vector<4x64xbf16>, vector<32x64xbf16>, vector<4x32xf32> -> vector<4x32xf32>
    %cst_11 = arith.constant dense<0.000000e+00> : vector<32xf32>
    %13 = vector.multi_reduction <add>, %12, %cst_11 [0] : vector<4x32xf32> to vector<32xf32>
    %14 = vector.shape_cast %13 : vector<32xf32> to vector<1x32xf32>
    %cst_12 = arith.constant 4.000000e+00 : f32
    %15 = vector.broadcast %cst_12 : f32 to vector<1x32xf32>
    %16 = arith.divf %14, %15 : vector<1x32xf32>
    %17 = vector.broadcast %16 : vector<1x32xf32> to vector<4x32xf32>
    %18 = arith.subf %12, %17 : vector<4x32xf32>
    %19 = arith.mulf %18, %18 : vector<4x32xf32>
    %cst_13 = arith.constant dense<0.000000e+00> : vector<32xf32>
    %20 = vector.multi_reduction <add>, %19, %cst_13 [0] : vector<4x32xf32> to vector<32xf32>
    %21 = vector.shape_cast %20 : vector<32xf32> to vector<1x32xf32>
    %cst_14 = arith.constant 4.000000e+00 : f32
    %22 = vector.broadcast %cst_14 : f32 to vector<1x32xf32>
    %23 = arith.divf %21, %22 : vector<1x32xf32>
    %24 = vector.broadcast %16 : vector<1x32xf32> to vector<4x32xf32>
    %25 = arith.subf %12, %24 : vector<4x32xf32>
    %cst_15 = arith.constant 9.99999974E-6 : f32
    %26 = vector.broadcast %cst_15 : f32 to vector<1x32xf32>
    %27 = arith.addf %23, %26 : vector<1x32xf32>
    %28 = math.rsqrt %27 : vector<1x32xf32>
    %29 = vector.broadcast %28 : vector<1x32xf32> to vector<4x32xf32>
    %30 = arith.mulf %25, %29 : vector<4x32xf32>
    %c0_16 = arith.constant 0 : index
    %c0_17 = arith.constant 0 : index
    %c0_18 = arith.constant 0 : index
    %31 = vector.load %arg3[%c0_16, %c0_17, %c0_18] : memref<1x1x32xf32, #tpu.memory_space<vmem>>, vector<1x1x32xf32>
    %32 = vector.shape_cast %31 : vector<1x1x32xf32> to vector<1x32xf32>
    %33 = vector.broadcast %32 : vector<1x32xf32> to vector<4x32xf32>
    %34 = arith.mulf %30, %33 : vector<4x32xf32>
    %c0_19 = arith.constant 0 : index
    %c0_20 = arith.constant 0 : index
    %c0_21 = arith.constant 0 : index
    %35 = vector.load %arg4[%c0_19, %c0_20, %c0_21] : memref<1x1x32xf32, #tpu.memory_space<vmem>>, vector<1x1x32xf32>
    %36 = vector.shape_cast %35 : vector<1x1x32xf32> to vector<1x32xf32>
    %37 = vector.broadcast %36 : vector<1x32xf32> to vector<4x32xf32>
    %38 = arith.addf %34, %37 : vector<4x32xf32>
    %39 = arith.truncf %38 : vector<4x32xf32> to vector<4x32xbf16>
    %c0_22 = arith.constant 0 : index
    %c0_23 = arith.constant 0 : index
    %c0_24 = arith.constant 0 : index
    %40 = vector.load %arg5[%c0_22, %c0_23, %c0_24] : memref<1x16x32xbf16, #tpu.memory_space<vmem>>, vector<1x16x32xbf16>
    %41 = vector.shape_cast %40 : vector<1x16x32xbf16> to vector<16x32xbf16>
    %cst_25 = arith.constant dense<0.000000e+00> : vector<4x16xf32>
    %42 = tpu.matmul %39, %41, %cst_25 {dimension_numbers = #tpu.dot_dimension_numbers<[1], [1], [0], [0], [0, 0, 1, 0], [], []>} : vector<4x32xbf16>, vector<16x32xbf16>, vector<4x16xf32> -> vector<4x16xf32>
    %c0_26 = arith.constant 0 : index
    %c0_27 = arith.constant 0 : index
    %c0_28 = arith.constant 0 : index
    %43 = vector.load %arg6[%c0_26, %c0_27, %c0_28] : memref<1x4x16xf32, #tpu.memory_space<vmem>>, vector<1x4x16xf32>
    %44 = vector.shape_cast %43 : vector<1x4x16xf32> to vector<4x16xf32>
    %45 = vector.shape_cast %42 : vector<4x16xf32> to vector<1x4x16xf32>
    tpu.vector_store %arg6[%c0_26, %c0_27, %c0_28], %45 {strides = array<i32>} : memref<1x4x16xf32, #tpu.memory_space<vmem>>, vector<1x4x16xf32>,
    return
  }
  func.func @transform_0(%arg0: i32) -> (i32, i32, i32, i32) {
    %c0_i32 = arith.constant 0 : i32
    %c0_i32_0 = arith.constant 0 : i32
    %c0_i32_1 = arith.constant 0 : i32
    %c0_i32_2 = arith.constant 0 : i32
    return %arg0, %c0_i32, %c0_i32_0, %c0_i32_1 : i32, i32, i32, i32
  }
  func.func @transform_1(%arg0: i32) -> (i32, i32, i32) {
    %c0_i32 = arith.constant 0 : i32
    %c0_i32_0 = arith.constant 0 : i32
    %c0_i32_1 = arith.constant 0 : i32
    return %arg0, %c0_i32, %c0_i32_0 : i32, i32, i32
  }
  func.func @transform_2(%arg0: i32) -> (i32, i32, i32) {
    %c0_i32 = arith.constant 0 : i32
    %c0_i32_0 = arith.constant 0 : i32
    %c0_i32_1 = arith.constant 0 : i32
    return %arg0, %c0_i32, %c0_i32_0 : i32, i32, i32
  }
  func.func @transform_3(%arg0: i32) -> (i32, i32, i32) {
    %c0_i32 = arith.constant 0 : i32
    %c0_i32_0 = arith.constant 0 : i32
    %c0_i32_1 = arith.constant 0 : i32
    return %arg0, %c0_i32, %c0_i32_0 : i32, i32, i32
  }
  func.func @transform_4(%arg0: i32) -> (i32, i32, i32) {
    %c0_i32 = arith.constant 0 : i32
    %c0_i32_0 = arith.constant 0 : i32
    %c0_i32_1 = arith.constant 0 : i32
    return %arg0, %c0_i32, %c0_i32_0 : i32, i32, i32
  }
  func.func @transform_5(%arg0: i32) -> (i32, i32, i32) {
    %c0_i32 = arith.constant 0 : i32
    %c0_i32_0 = arith.constant 0 : i32
    %c0_i32_1 = arith.constant 0 : i32
    return %arg0, %c0_i32, %c0_i32_0 : i32, i32, i32
  }
  func.func @transform_6(%arg0: i32) -> (i32, i32, i32) {
    %c0_i32 = arith.constant 0 : i32
    %c0_i32_0 = arith.constant 0 : i32
    %c0_i32_1 = arith.constant 0 : i32
    return %arg0, %c0_i32, %c0_i32_0 : i32, i32, i32
  }
}

</mosaic_0001>

<llo_original>
// kernel: multihead_forward.1
$region0: #{multihead_forward.1}
  #allocation0 [shape = 'u32[]', space=smem, size = 0x4, offset = 0x4, fixed_abs, tag = 'smem constant byte address 0x4 - core index']
  #allocation1 [shape = 'u32[144,128]{1,0:T(1,128)}', space=vmem, size = 0x12000, scoped, tag = 'internal scratch']
  %s0 = inlined_call_operand.vmem [shape: bf16[2,4,64,64], index: 0, kind: input, shape index: {}]
  %s1 = inlined_call_operand.vmem [shape: bf16[2,32,64], index: 1, kind: input, shape index: {}]
  %s2 = inlined_call_operand.vmem [shape: f32[2,1,32], index: 2, kind: input, shape index: {}]
  %s3 = inlined_call_operand.vmem [shape: f32[2,1,32], index: 3, kind: input, shape index: {}]
  %s4 = inlined_call_operand.vmem [shape: bf16[2,16,32], index: 4, kind: input, shape index: {}]
  %s5 = inlined_call_operand.vmem [shape: f32[2,4,16], index: 5, kind: output, shape index: {0}]
  %s6 = inlined_call_operand.vmem [shape: f32[2,4,64], index: 6, kind: output, shape index: {1}]
  %7 = xla_tuple %s5, %s6
  %s8 = sld [smem:[#allocation0]]
  $region61: #{multihead_forward.1} parent=0
    _
  %s10 = ssub.s32 1, %s8
  %s11 = scalar_select 0, %s10, %s8
  loop: start=0, step=1, limit=4
  $region2: #{multihead_forward.1} parent=0 // loop_pre_header
    _
  $region3: #{multihead_forward.1} parent=0 // loop_header
    %s13 = sphi 0, %s17
    %p14 = scmp.ge.s32.totalorder %s13, 4
    %s23 = sphi 0, %s25
    %s26 = sphi 0, %s23
    %s27 = sphi 0, %s26
    %s43 = sphi 0, %s27
    %s49 = sphi 0, %s51
    %s52 = sphi 0, %s49
    %s53 = sphi 0, %s52
    %s69 = sphi 0, %s53
    %s75 = sphi 0, %s77
    %s78 = sphi 0, %s75
    %s79 = sphi 0, %s78
    %s95 = sphi 0, %s79
    %s101 = sphi 0, %s103
    %s104 = sphi 0, %s101
    %s105 = sphi 0, %s104
    %s121 = sphi 0, %s105
    %s127 = sphi 0, %s129
    %s130 = sphi 0, %s127
    %s131 = sphi 0, %s130
    %s147 = sphi 0, %s131
    %s153 = sphi 0, %s155
    %s156 = sphi 0, %s153
    %s157 = sphi 0, %s156
    %s173 = sphi 0, %s157
    %s179 = sphi 0, %s181
    %s182 = sphi 0, %s179
    %s183 = sphi 0, %s182
    %s199 = sphi 0, %s183
  $region4: #{multihead_forward.1} parent=0 // loop_header_branch
    %16 = sbr.rel (%p14) target = $region8
  $region5: #{multihead_forward.1} parent=0 // loop_body
    %s18 = ssub.s32 %s13, 1
    %s19 = ssub.s32 %s13, 2
    %s20 = sadd.s32 %s13, 1
    %s21 = ssub.s32 %s13, %s20
    %p22 = scmp.eq.s32.totalorder %s21, 0
    %s24 = sadd.s32 %s23, 1
    %s25 = scalar_select %p22, %s23, %s24
    %p28 = pneg %p22
    %p29 = scmp.eq.s32.totalorder %s13, 1
    %p30 = por %p28, %p29
    %p31 = scmp.ne.s32.totalorder %s23, %s26
    %p32 = scmp.eq.s32.totalorder %s13, 0
    %p33 = por %p31, %p32
    %p34 = scmp.ne.s32.totalorder %s23, %s26
    %p35 = scmp.eq.s32.totalorder %s18, 1
    %p36 = por %p34, %p35
    %p37 = scmp.ne.s32.totalorder %s26, %s27
    %p38 = scmp.eq.s32.totalorder %s18, 0
    %p39 = por %p37, %p38
    %p40 = scmp.ne.s32.totalorder %s26, %s27
    %p41 = scmp.eq.s32.totalorder %s19, 1
    %p42 = por %p40, %p41
    %p44 = scmp.ne.s32.totalorder %s27, %s43
    %p45 = scmp.eq.s32.totalorder %s19, 0
    %p46 = por %p44, %p45
    %s47 = ssub.s32 %s13, %s20
    %p48 = scmp.eq.s32.totalorder %s47, 0
    %s50 = sadd.s32 %s49, 1
    %s51 = scalar_select %p48, %s49, %s50
    %p54 = pneg %p48
    %p55 = scmp.eq.s32.totalorder %s13, 1
    %p56 = por %p54, %p55
    %p57 = scmp.ne.s32.totalorder %s49, %s52
    %p58 = scmp.eq.s32.totalorder %s13, 0
    %p59 = por %p57, %p58
    %p60 = scmp.ne.s32.totalorder %s49, %s52
    %p61 = scmp.eq.s32.totalorder %s18, 1
    %p62 = por %p60, %p61
    %p63 = scmp.ne.s32.totalorder %s52, %s53
    %p64 = scmp.eq.s32.totalorder %s18, 0
    %p65 = por %p63, %p64
    %p66 = scmp.ne.s32.totalorder %s52, %s53
    %p67 = scmp.eq.s32.totalorder %s19, 1
    %p68 = por %p66, %p67
    %p70 = scmp.ne.s32.totalorder %s53, %s69
    %p71 = scmp.eq.s32.totalorder %s19, 0
    %p72 = por %p70, %p71
    %s73 = ssub.s32 %s13, %s20
    %p74 = scmp.eq.s32.totalorder %s73, 0
    %s76 = sadd.s32 %s75, 1
    %s77 = scalar_select %p74, %s75, %s76
    %p80 = pneg %p74
    %p81 = scmp.eq.s32.totalorder %s13, 1
    %p82 = por %p80, %p81
    %p83 = scmp.ne.s32.totalorder %s75, %s78
    %p84 = scmp.eq.s32.totalorder %s13, 0
    %p85 = por %p83, %p84
    %p86 = scmp.ne.s32.totalorder %s75, %s78
    %p87 = scmp.eq.s32.totalorder %s18, 1
    %p88 = por %p86, %p87
    %p89 = scmp.ne.s32.totalorder %s78, %s79
    %p90 = scmp.eq.s32.totalorder %s18, 0
    %p91 = por %p89, %p90
    %p92 = scmp.ne.s32.totalorder %s78, %s79
    %p93 = scmp.eq.s32.totalorder %s19, 1
    %p94 = por %p92, %p93
    %p96 = scmp.ne.s32.totalorder %s79, %s95
    %p97 = scmp.eq.s32.totalorder %s19, 0
    %p98 = por %p96, %p97
    %s99 = ssub.s32 %s13, %s20
    %p100 = scmp.eq.s32.totalorder %s99, 0
    %s102 = sadd.s32 %s101, 1
    %s103 = scalar_select %p100, %s101, %s102
    %p106 = pneg %p100
    %p107 = scmp.eq.s32.totalorder %s13, 1
    %p108 = por %p106, %p107
    %p109 = scmp.ne.s32.totalorder %s101, %s104
    %p110 = scmp.eq.s32.totalorder %s13, 0
    %p111 = por %p109, %p110
    %p112 = scmp.ne.s32.totalorder %s101, %s104
    %p113 = scmp.eq.s32.totalorder %s18, 1
    %p114 = por %p112, %p113
    %p115 = scmp.ne.s32.totalorder %s104, %s105
    %p116 = scmp.eq.s32.totalorder %s18, 0
    %p117 = por %p115, %p116
    %p118 = scmp.ne.s32.totalorder %s104, %s105
    %p119 = scmp.eq.s32.totalorder %s19, 1
    %p120 = por %p118, %p119
    %p122 = scmp.ne.s32.totalorder %s105, %s121
    %p123 = scmp.eq.s32.totalorder %s19, 0
    %p124 = por %p122, %p123
    %s125 = ssub.s32 %s13, %s20
    %p126 = scmp.eq.s32.totalorder %s125, 0
    %s128 = sadd.s32 %s127, 1
    %s129 = scalar_select %p126, %s127, %s128
    %p132 = pneg %p126
    %p133 = scmp.eq.s32.totalorder %s13, 1
    %p134 = por %p132, %p133
    %p135 = scmp.ne.s32.totalorder %s127, %s130
    %p136 = scmp.eq.s32.totalorder %s13, 0
    %p137 = por %p135, %p136
    %p138 = scmp.ne.s32.totalorder %s127, %s130
    %p139 = scmp.eq.s32.totalorder %s18, 1
    %p140 = por %p138, %p139
    %p141 = scmp.ne.s32.totalorder %s130, %s131
    %p142 = scmp.eq.s32.totalorder %s18, 0
    %p143 = por %p141, %p142
    %p144 = scmp.ne.s32.totalorder %s130, %s131
    %p145 = scmp.eq.s32.totalorder %s19, 1
    %p146 = por %p144, %p145
    %p148 = scmp.ne.s32.totalorder %s131, %s147
    %p149 = scmp.eq.s32.totalorder %s19, 0
    %p150 = por %p148, %p149
    %s151 = ssub.s32 %s13, %s20
    %p152 = scmp.eq.s32.totalorder %s151, 0
    %s154 = sadd.s32 %s153, 1
    %s155 = scalar_select %p152, %s153, %s154
    %p158 = pneg %p152
    %p159 = scmp.eq.s32.totalorder %s13, 1
    %p160 = por %p158, %p159
    %p161 = scmp.ne.s32.totalorder %s153, %s156
    %p162 = scmp.eq.s32.totalorder %s13, 0
    %p163 = por %p161, %p162
    %p164 = scmp.ne.s32.totalorder %s153, %s156
    %p165 = scmp.eq.s32.totalorder %s18, 1
    %p166 = por %p164, %p165
    %p167 = scmp.ne.s32.totalorder %s156, %s157
    %p168 = scmp.eq.s32.totalorder %s18, 0
    %p169 = por %p167, %p168
    %p170 = scmp.ne.s32.totalorder %s156, %s157
    %p171 = scmp.eq.s32.totalorder %s19, 1
    %p172 = por %p170, %p171
    %p174 = scmp.ne.s32.totalorder %s157, %s173
    %p175 = scmp.eq.s32.totalorder %s19, 0
    %p176 = por %p174, %p175
    %s177 = ssub.s32 %s13, %s20
    %p178 = scmp.eq.s32.totalorder %s177, 0
    %s180 = sadd.s32 %s179, 1
    %s181 = scalar_select %p178, %s179, %s180
    %p184 = pneg %p178
    %p185 = scmp.eq.s32.totalorder %s13, 1
    %p186 = por %p184, %p185
    %p187 = scmp.ne.s32.totalorder %s179, %s182
    %p188 = scmp.eq.s32.totalorder %s13, 0
    %p189 = por %p187, %p188
    %p190 = scmp.ne.s32.totalorder %s179, %s182
    %p191 = scmp.eq.s32.totalorder %s18, 1
    %p192 = por %p190, %p191
    %p193 = scmp.ne.s32.totalorder %s182, %s183
    %p194 = scmp.eq.s32.totalorder %s18, 0
    %p195 = por %p193, %p194
    %p196 = scmp.ne.s32.totalorder %s182, %s183
    %p197 = scmp.eq.s32.totalorder %s19, 1
    %p198 = por %p196, %p197
    %p200 = scmp.ne.s32.totalorder %s183, %s199
    %p201 = scmp.eq.s32.totalorder %s19, 0
    %p202 = por %p200, %p201
    %p203 = scmp.le.s32.totalorder 1, %s13
    %p204 = scmp.lt.s32.totalorder %s13, 3
    %p205 = pnand %p203, %p204
    %p206 = pneg %p205
    // Predicated region
    $region9: #{multihead_forward.1} parent=5 // pred_check
      _
    $region10: #{multihead_forward.1} parent=5 // pred_check_branch
      %208 = sbr.rel (%p205) target = $region12
    $region11: #{multihead_forward.1} parent=5 // pred_region
      %s209 = ssub.s32 %s13, 1
    $region12: #{multihead_forward.1} parent=5 // pred_fallthru
      _
    %p210 = scmp.lt.s32.totalorder %s13, 2
    // Predicated region
    $region13: #{multihead_forward.1} parent=5 // pred_check
      %p211 = pneg %p210
    $region14: #{multihead_forward.1} parent=5 // pred_check_branch
      %213 = sbr.rel (%p211) target = $region16
    $region15: #{multihead_forward.1} parent=5 // pred_region
      // Predicated region
      $region17: #{multihead_forward.1} parent=15 // pred_check
        %p214 = pneg %p33
      $region18: #{multihead_forward.1} parent=15 // pred_check_branch
        %216 = sbr.rel (%p214) target = $region20
      $region19: #{multihead_forward.1} parent=15 // pred_region
        %p217 = scmp.lt.s32.totalorder %s13, 1
        %s218 = scalar_select %p217, %s13, 1
        %s219 = smul.addr %s218, 32
        %s220 = smul.addr %s219, 4
        %s221 = scalar_lea.vmem %s0, %s220
      $region20: #{multihead_forward.1} parent=15 // pred_fallthru
        _
      // Predicated region
      $region21: #{multihead_forward.1} parent=15 // pred_check
        %p222 = pneg %p59
      $region22: #{multihead_forward.1} parent=15 // pred_check_branch
        %224 = sbr.rel (%p222) target = $region24
      $region23: #{multihead_forward.1} parent=15 // pred_region
        %p225 = scmp.lt.s32.totalorder %s13, 1
        %s226 = scalar_select %p225, %s13, 1
        %s227 = smul.addr %s226, 4
        %s228 = smul.addr %s227, 4
        %s229 = scalar_lea.vmem %s1, %s228
      $region24: #{multihead_forward.1} parent=15 // pred_fallthru
        _
      // Predicated region
      $region25: #{multihead_forward.1} parent=15 // pred_check
        %p230 = pneg %p85
      $region26: #{multihead_forward.1} parent=15 // pred_check_branch
        %232 = sbr.rel (%p230) target = $region28
      $region27: #{multihead_forward.1} parent=15 // pred_region
        %p233 = scmp.lt.s32.totalorder %s13, 1
        %s234 = scalar_select %p233, %s13, 1
        %s235 = scalar_lea.vmem %s2, %s234
      $region28: #{multihead_forward.1} parent=15 // pred_fallthru
        _
      // Predicated region
      $region29: #{multihead_forward.1} parent=15 // pred_check
        %p236 = pneg %p111
      $region30: #{multihead_forward.1} parent=15 // pred_check_branch
        %238 = sbr.rel (%p236) target = $region32
      $region31: #{multihead_forward.1} parent=15 // pred_region
        %p239 = scmp.lt.s32.totalorder %s13, 1
        %s240 = scalar_select %p239, %s13, 1
        %s241 = scalar_lea.vmem %s3, %s240
      $region32: #{multihead_forward.1} parent=15 // pred_fallthru
        _
      // Predicated region
      $region33: #{multihead_forward.1} parent=15 // pred_check
        %p242 = pneg %p137
      $region34: #{multihead_forward.1} parent=15 // pred_check_branch
        %244 = sbr.rel (%p242) target = $region36
      $region35: #{multihead_forward.1} parent=15 // pred_region
        %p245 = scmp.lt.s32.totalorder %s13, 1
        %s246 = scalar_select %p245, %s13, 1
        %s247 = smul.addr %s246, 2
        %s248 = smul.addr %s247, 4
        %s249 = scalar_lea.vmem %s4, %s248
      $region36: #{multihead_forward.1} parent=15 // pred_fallthru
        _
    $region16: #{multihead_forward.1} parent=5 // pred_fallthru
      _
    %p250 = scmp.le.s32.totalorder 1, %s13
    %p251 = scmp.lt.s32.totalorder %s13, 3
    %p252 = pnand %p250, %p251
    %p253 = pneg %p252
    // Predicated region
    $region37: #{multihead_forward.1} parent=5 // pred_check
      _
    $region38: #{multihead_forward.1} parent=5 // pred_check_branch
      %255 = sbr.rel (%p252) target = $region40
    $region39: #{multihead_forward.1} parent=5 // pred_region
      %s256 = ssub.s32 %s13, 1
      %p257 = scmp.lt.s32.totalorder %s18, 1
      %s258 = scalar_select %p257, %s18, 1
      %s259 = smul.addr %s258, 32
      %s260 = smul.addr %s259, 4
      %s261 = scalar_lea.vmem %s0, %s260
      %p262 = pneg %p39
      %p263 = pneg %p36
      %p264 = scmp.lt.s32.totalorder %s18, 1
      %s265 = scalar_select %p264, %s18, 1
      %s266 = smul.addr %s265, 4
      %s267 = smul.addr %s266, 4
      %s268 = scalar_lea.vmem %s1, %s267
      %p269 = pneg %p65
      %p270 = pneg %p62
      %p271 = scmp.lt.s32.totalorder %s18, 1
      %s272 = scalar_select %p271, %s18, 1
      %s273 = scalar_lea.vmem %s2, %s272
      %p274 = pneg %p91
      %p275 = pneg %p88
      %p276 = scmp.lt.s32.totalorder %s18, 1
      %s277 = scalar_select %p276, %s18, 1
      %s278 = scalar_lea.vmem %s3, %s277
      %p279 = pneg %p117
      %p280 = pneg %p114
      %p281 = scmp.lt.s32.totalorder %s18, 1
      %s282 = scalar_select %p281, %s18, 1
      %s283 = smul.addr %s282, 2
      %s284 = smul.addr %s283, 4
      %s285 = scalar_lea.vmem %s4, %s284
      %p286 = pneg %p143
      %p287 = pneg %p140
      %p288 = pneg %p169
      %p289 = pneg %p166
      %p290 = scmp.lt.s32.totalorder %s18, 1
      %s291 = scalar_select %p290, %s18, 1
      %s292 = smul.addr %s291, 4
      %s293 = scalar_lea.vmem %s5, %s292
      %p294 = pneg %p195
      %p295 = pneg %p192
      %p296 = scmp.lt.s32.totalorder %s18, 1
      %s297 = scalar_select %p296, %s18, 1
      %s298 = smul.addr %s297, 4
      %s299 = scalar_lea.vmem %s6, %s298
      %p300 = scmp.lt.s32.totalorder %s18, 1
      %s301 = scalar_select %p300, %s18, 1
      %s302 = smul.addr %s301, 32
      %s303 = smul.addr %s302, 4
      %s304 = scalar_lea.vmem %s0, %s303
      %p305 = scmp.lt.s32.totalorder %s18, 1
      %s306 = scalar_select %p305, %s18, 1
      %s307 = smul.addr %s306, 4
      %s308 = smul.addr %s307, 4
      %s309 = scalar_lea.vmem %s1, %s308
      %p310 = scmp.lt.s32.totalorder %s18, 1
      %s311 = scalar_select %p310, %s18, 1
      %s312 = scalar_lea.vmem %s2, %s311
      %p313 = scmp.lt.s32.totalorder %s18, 1
      %s314 = scalar_select %p313, %s18, 1
      %s315 = scalar_lea.vmem %s3, %s314
      %p316 = scmp.lt.s32.totalorder %s18, 1
      %s317 = scalar_select %p316, %s18, 1
      %s318 = smul.addr %s317, 2
      %s319 = smul.addr %s318, 4
      %s320 = scalar_lea.vmem %s4, %s319
      %p321 = scmp.lt.s32.totalorder %s18, 1
      %s322 = scalar_select %p321, %s18, 1
      %s323 = smul.addr %s322, 4
      %s324 = scalar_lea.vmem %s5, %s323
      %p325 = scmp.lt.s32.totalorder %s18, 1
      %s326 = scalar_select %p325, %s18, 1
      %s327 = smul.addr %s326, 4
      %s328 = scalar_lea.vmem %s6, %s327
      %v330 = vld [vmem:[%s304] sm:$0xf]
      %v331 = vld [vmem:[%s304 + $0x4] sm:$0xf]
      %v332 = vld [vmem:[%s304 + $0x8] sm:$0xf]
      %v333 = vld [vmem:[%s304 + $0xc] sm:$0xf]
      %v334 = vld [vmem:[%s304 + $0x10] sm:$0xf]
      %v335 = vld [vmem:[%s304 + $0x14] sm:$0xf]
      %v336 = vld [vmem:[%s304 + $0x18] sm:$0xf]
      %v337 = vld [vmem:[%s304 + $0x1c] sm:$0xf]
      %v338 = vld [vmem:[%s304 + $0x20] sm:$0xf]
      %v339 = vld [vmem:[%s304 + $0x24] sm:$0xf]
      %v340 = vld [vmem:[%s304 + $0x28] sm:$0xf]
      %v341 = vld [vmem:[%s304 + $0x2c] sm:$0xf]
      %v342 = vld [vmem:[%s304 + $0x30] sm:$0xf]
      %v343 = vld [vmem:[%s304 + $0x34] sm:$0xf]
      %v344 = vld [vmem:[%s304 + $0x38] sm:$0xf]
      %v345 = vld [vmem:[%s304 + $0x3c] sm:$0xf]
      %v346 = vld [vmem:[%s304 + $0x40] sm:$0xf]
      %v347 = vld [vmem:[%s304 + $0x44] sm:$0xf]
      %v348 = vld [vmem:[%s304 + $0x48] sm:$0xf]
      %v349 = vld [vmem:[%s304 + $0x4c] sm:$0xf]
      %v350 = vld [vmem:[%s304 + $0x50] sm:$0xf]
      %v351 = vld [vmem:[%s304 + $0x54] sm:$0xf]
      %v352 = vld [vmem:[%s304 + $0x58] sm:$0xf]
      %v353 = vld [vmem:[%s304 + $0x5c] sm:$0xf]
      %v354 = vld [vmem:[%s304 + $0x60] sm:$0xf]
      %v355 = vld [vmem:[%s304 + $0x64] sm:$0xf]
      %v356 = vld [vmem:[%s304 + $0x68] sm:$0xf]
      %v357 = vld [vmem:[%s304 + $0x6c] sm:$0xf]
      %v358 = vld [vmem:[%s304 + $0x70] sm:$0xf]
      %v359 = vld [vmem:[%s304 + $0x74] sm:$0xf]
      %v360 = vld [vmem:[%s304 + $0x78] sm:$0xf]
      %v361 = vld [vmem:[%s304 + $0x7c] sm:$0xf]
      %v362 = vunpack.c.l.bf16 %v330
      %v363 = vunpack.c.l.bf16 %v331
      %v364 = vunpack.c.l.bf16 %v332
      %v365 = vunpack.c.l.bf16 %v333
      %v366 = vunpack.c.l.bf16 %v334
      %v367 = vunpack.c.l.bf16 %v335
      %v368 = vunpack.c.l.bf16 %v336
      %v369 = vunpack.c.l.bf16 %v337
      %v370 = vunpack.c.l.bf16 %v338
      %v371 = vunpack.c.l.bf16 %v339
      %v372 = vunpack.c.l.bf16 %v340
      %v373 = vunpack.c.l.bf16 %v341
      %v374 = vunpack.c.l.bf16 %v342
      %v375 = vunpack.c.l.bf16 %v343
      %v376 = vunpack.c.l.bf16 %v344
      %v377 = vunpack.c.l.bf16 %v345
      %v378 = vunpack.c.l.bf16 %v346
      %v379 = vunpack.c.l.bf16 %v347
      %v380 = vunpack.c.l.bf16 %v348
      %v381 = vunpack.c.l.bf16 %v349
      %v382 = vunpack.c.l.bf16 %v350
      %v383 = vunpack.c.l.bf16 %v351
      %v384 = vunpack.c.l.bf16 %v352
      %v385 = vunpack.c.l.bf16 %v353
      %v386 = vunpack.c.l.bf16 %v354
      %v387 = vunpack.c.l.bf16 %v355
      %v388 = vunpack.c.l.bf16 %v356
      %v389 = vunpack.c.l.bf16 %v357
      %v390 = vunpack.c.l.bf16 %v358
      %v391 = vunpack.c.l.bf16 %v359
      %v392 = vunpack.c.l.bf16 %v360
      %v393 = vunpack.c.l.bf16 %v361
      %vm394 = vcmask 523264
      %v395 = vsel %vm394, %v362, 0.0
      %396 = vadd.xlane.f32.xlu0 %v395
      %v397 = vpop.xlane.xlu0 %396
      %v398 = vsel %vm394, %v363, 0.0
      %399 = vadd.xlane.f32.xlu0 %v398
      %v400 = vpop.xlane.xlu0 %399
      %v401 = vsel %vm394, %v364, 0.0
      %402 = vadd.xlane.f32.xlu0 %v401
      %v403 = vpop.xlane.xlu0 %402
      %v404 = vsel %vm394, %v365, 0.0
      %405 = vadd.xlane.f32.xlu0 %v404
      %v406 = vpop.xlane.xlu0 %405
      %v407 = vsel %vm394, %v366, 0.0
      %408 = vadd.xlane.f32.xlu0 %v407
      %v409 = vpop.xlane.xlu0 %408
      %v410 = vsel %vm394, %v367, 0.0
      %411 = vadd.xlane.f32.xlu0 %v410
      %v412 = vpop.xlane.xlu0 %411
      %v413 = vsel %vm394, %v368, 0.0
      %414 = vadd.xlane.f32.xlu0 %v413
      %v415 = vpop.xlane.xlu0 %414
      %v416 = vsel %vm394, %v369, 0.0
      %417 = vadd.xlane.f32.xlu0 %v416
      %v418 = vpop.xlane.xlu0 %417
      %v419 = vsel %vm394, %v370, 0.0
      %420 = vadd.xlane.f32.xlu0 %v419
      %v421 = vpop.xlane.xlu0 %420
      %v422 = vsel %vm394, %v371, 0.0
      %423 = vadd.xlane.f32.xlu0 %v422
      %v424 = vpop.xlane.xlu0 %423
      %v425 = vsel %vm394, %v372, 0.0
      %426 = vadd.xlane.f32.xlu0 %v425
      %v427 = vpop.xlane.xlu0 %426
      %v428 = vsel %vm394, %v373, 0.0
      %429 = vadd.xlane.f32.xlu0 %v428
      %v430 = vpop.xlane.xlu0 %429
      %v431 = vsel %vm394, %v374, 0.0
      %432 = vadd.xlane.f32.xlu0 %v431
      %v433 = vpop.xlane.xlu0 %432
      %v434 = vsel %vm394, %v375, 0.0
      %435 = vadd.xlane.f32.xlu0 %v434
      %v436 = vpop.xlane.xlu0 %435
      %v437 = vsel %vm394, %v376, 0.0
      %438 = vadd.xlane.f32.xlu0 %v437
      %v439 = vpop.xlane.xlu0 %438
      %v440 = vsel %vm394, %v377, 0.0
      %441 = vadd.xlane.f32.xlu0 %v440
      %v442 = vpop.xlane.xlu0 %441
      %v443 = vsel %vm394, %v378, 0.0
      %444 = vadd.xlane.f32.xlu0 %v443
      %v445 = vpop.xlane.xlu0 %444
      %v446 = vsel %vm394, %v379, 0.0
      %447 = vadd.xlane.f32.xlu0 %v446
      %v448 = vpop.xlane.xlu0 %447
      %v449 = vsel %vm394, %v380, 0.0
      %450 = vadd.xlane.f32.xlu0 %v449
      %v451 = vpop.xlane.xlu0 %450
      %v452 = vsel %vm394, %v381, 0.0
      %453 = vadd.xlane.f32.xlu0 %v452
      %v454 = vpop.xlane.xlu0 %453
      %v455 = vsel %vm394, %v382, 0.0
      %456 = vadd.xlane.f32.xlu0 %v455
      %v457 = vpop.xlane.xlu0 %456
      %v458 = vsel %vm394, %v383, 0.0
      %459 = vadd.xlane.f32.xlu0 %v458
      %v460 = vpop.xlane.xlu0 %459
      %v461 = vsel %vm394, %v384, 0.0
      %462 = vadd.xlane.f32.xlu0 %v461
      %v463 = vpop.xlane.xlu0 %462
      %v464 = vsel %vm394, %v385, 0.0
      %465 = vadd.xlane.f32.xlu0 %v464
      %v466 = vpop.xlane.xlu0 %465
      %v467 = vsel %vm394, %v386, 0.0
      %468 = vadd.xlane.f32.xlu0 %v467
      %v469 = vpop.xlane.xlu0 %468
      %v470 = vsel %vm394, %v387, 0.0
      %471 = vadd.xlane.f32.xlu0 %v470
      %v472 = vpop.xlane.xlu0 %471
      %v473 = vsel %vm394, %v388, 0.0
      %474 = vadd.xlane.f32.xlu0 %v473
      %v475 = vpop.xlane.xlu0 %474
      %v476 = vsel %vm394, %v389, 0.0
      %477 = vadd.xlane.f32.xlu0 %v476
      %v478 = vpop.xlane.xlu0 %477
      %v479 = vsel %vm394, %v390, 0.0
      %480 = vadd.xlane.f32.xlu0 %v479
      %v481 = vpop.xlane.xlu0 %480
      %v482 = vsel %vm394, %v391, 0.0
      %483 = vadd.xlane.f32.xlu0 %v482
      %v484 = vpop.xlane.xlu0 %483
      %v485 = vsel %vm394, %v392, 0.0
      %486 = vadd.xlane.f32.xlu0 %v485
      %v487 = vpop.xlane.xlu0 %486
      %v488 = vsel %vm394, %v393, 0.0
      %489 = vadd.xlane.f32.xlu0 %v488
      %v490 = vpop.xlane.xlu0 %489
      %v491 = vmul.f32 %v397, 0.015625
      %v492 = vmul.f32 %v400, 0.015625
      %v493 = vmul.f32 %v403, 0.015625
      %v494 = vmul.f32 %v406, 0.015625
      %v495 = vmul.f32 %v409, 0.015625
      %v496 = vmul.f32 %v412, 0.015625
      %v497 = vmul.f32 %v415, 0.015625
      %v498 = vmul.f32 %v418, 0.015625
      %v499 = vmul.f32 %v421, 0.015625
      %v500 = vmul.f32 %v424, 0.015625
      %v501 = vmul.f32 %v427, 0.015625
      %v502 = vmul.f32 %v430, 0.015625
      %v503 = vmul.f32 %v433, 0.015625
      %v504 = vmul.f32 %v436, 0.015625
      %v505 = vmul.f32 %v439, 0.015625
      %v506 = vmul.f32 %v442, 0.015625
      %v507 = vmul.f32 %v445, 0.015625
      %v508 = vmul.f32 %v448, 0.015625
      %v509 = vmul.f32 %v451, 0.015625
      %v510 = vmul.f32 %v454, 0.015625
      %v511 = vmul.f32 %v457, 0.015625
      %v512 = vmul.f32 %v460, 0.015625
      %v513 = vmul.f32 %v463, 0.015625
      %v514 = vmul.f32 %v466, 0.015625
      %v515 = vmul.f32 %v469, 0.015625
      %v516 = vmul.f32 %v472, 0.015625
      %v517 = vmul.f32 %v475, 0.015625
      %v518 = vmul.f32 %v478, 0.015625
      %v519 = vmul.f32 %v481, 0.015625
      %v520 = vmul.f32 %v484, 0.015625
      %v521 = vmul.f32 %v487, 0.015625
      %v522 = vmul.f32 %v490, 0.015625
      %v555 = vlaneseq
      %v556 = vand.u32 %v555, 127
      %v557 = vlaneseq
      %v558 = vshrl.u32 %v557, 7
      %v559 = vsub.s32 %v556, %v558
      %v560 = vrot.slane %v491, %v559
      %v561 = vadd.s32 %v556, 4294967288
      %v562 = vlaneseq
      %v563 = vshrl.u32 %v562, 7
      %v564 = vsub.s32 %v561, %v563
      %v565 = vrot.slane %v492, %v564
      %vm566 = vcmask 130112
      %v567 = vsel %vm566, %v565, %v560
      %v568 = vadd.s32 %v556, 4294967280
      %v569 = vlaneseq
      %v570 = vshrl.u32 %v569, 7
      %v571 = vsub.s32 %v568, %v570
      %v572 = vrot.slane %v493, %v571
      %vm573 = vcmask 195712
      %v574 = vsel %vm573, %v572, %v567
      %v575 = vadd.s32 %v556, 4294967272
      %v576 = vlaneseq
      %v577 = vshrl.u32 %v576, 7
      %v578 = vsub.s32 %v575, %v577
      %v579 = vrot.slane %v494, %v578
      %vm580 = vcmask 261312
      %v581 = vsel %vm580, %v579, %v574
      %v582 = vadd.s32 %v556, 4294967264
      %v583 = vlaneseq
      %v584 = vshrl.u32 %v583, 7
      %v585 = vsub.s32 %v582, %v584
      %v586 = vrot.slane %v495, %v585
      %vm587 = vcmask 326912
      %v588 = vsel %vm587, %v586, %v581
      %v589 = vadd.s32 %v556, 4294967256
      %v590 = vlaneseq
      %v591 = vshrl.u32 %v590, 7
      %v592 = vsub.s32 %v589, %v591
      %v593 = vrot.slane %v496, %v592
      %vm594 = vcmask 392512
      %v595 = vsel %vm594, %v593, %v588
      %v596 = vadd.s32 %v556, 4294967248
      %v597 = vlaneseq
      %v598 = vshrl.u32 %v597, 7
      %v599 = vsub.s32 %v596, %v598
      %v600 = vrot.slane %v497, %v599
      %vm601 = vcmask 458112
      %v602 = vsel %vm601, %v600, %v595
      %v603 = vadd.s32 %v556, 4294967240
      %v604 = vlaneseq
      %v605 = vshrl.u32 %v604, 7
      %v606 = vsub.s32 %v603, %v605
      %v607 = vrot.slane %v498, %v606
      %vm608 = vcmask 523712
      %v609 = vsel %vm608, %v607, %v602
      %v610 = vlaneseq
      %v611 = vshrl.u32 %v610, 7
      %v612 = vsub.s32 %v556, %v611
      %v613 = vrot.slane %v499, %v612
      %v614 = vlaneseq
      %v615 = vshrl.u32 %v614, 7
      %v616 = vsub.s32 %v561, %v615
      %v617 = vrot.slane %v500, %v616
      %v618 = vsel %vm566, %v617, %v613
      %v619 = vlaneseq
      %v620 = vshrl.u32 %v619, 7
      %v621 = vsub.s32 %v568, %v620
      %v622 = vrot.slane %v501, %v621
      %v623 = vsel %vm573, %v622, %v618
      %v624 = vlaneseq
      %v625 = vshrl.u32 %v624, 7
      %v626 = vsub.s32 %v575, %v625
      %v627 = vrot.slane %v502, %v626
      %v628 = vsel %vm580, %v627, %v623
      %v629 = vlaneseq
      %v630 = vshrl.u32 %v629, 7
      %v631 = vsub.s32 %v582, %v630
      %v632 = vrot.slane %v503, %v631
      %v633 = vsel %vm587, %v632, %v628
      %v634 = vlaneseq
      %v635 = vshrl.u32 %v634, 7
      %v636 = vsub.s32 %v589, %v635
      %v637 = vrot.slane %v504, %v636
      %v638 = vsel %vm594, %v637, %v633
      %v639 = vlaneseq
      %v640 = vshrl.u32 %v639, 7
      %v641 = vsub.s32 %v596, %v640
      %v642 = vrot.slane %v505, %v641
      %v643 = vsel %vm601, %v642, %v638
      %v644 = vlaneseq
      %v645 = vshrl.u32 %v644, 7
      %v646 = vsub.s32 %v603, %v645
      %v647 = vrot.slane %v506, %v646
      %v648 = vsel %vm608, %v647, %v643
      %v649 = vlaneseq
      %v650 = vshrl.u32 %v649, 7
      %v651 = vsub.s32 %v556, %v650
      %v652 = vrot.slane %v507, %v651
      %v653 = vlaneseq
      %v654 = vshrl.u32 %v653, 7
      %v655 = vsub.s32 %v561, %v654
      %v656 = vrot.slane %v508, %v655
      %v657 = vsel %vm566, %v656, %v652
      %v658 = vlaneseq
      %v659 = vshrl.u32 %v658, 7
      %v660 = vsub.s32 %v568, %v659
      %v661 = vrot.slane %v509, %v660
      %v662 = vsel %vm573, %v661, %v657
      %v663 = vlaneseq
      %v664 = vshrl.u32 %v663, 7
      %v665 = vsub.s32 %v575, %v664
      %v666 = vrot.slane %v510, %v665
      %v667 = vsel %vm580, %v666, %v662
      %v668 = vlaneseq
      %v669 = vshrl.u32 %v668, 7
      %v670 = vsub.s32 %v582, %v669
      %v671 = vrot.slane %v511, %v670
      %v672 = vsel %vm587, %v671, %v667
      %v673 = vlaneseq
      %v674 = vshrl.u32 %v673, 7
      %v675 = vsub.s32 %v589, %v674
      %v676 = vrot.slane %v512, %v675
      %v677 = vsel %vm594, %v676, %v672
      %v678 = vlaneseq
      %v679 = vshrl.u32 %v678, 7
      %v680 = vsub.s32 %v596, %v679
      %v681 = vrot.slane %v513, %v680
      %v682 = vsel %vm601, %v681, %v677
      %v683 = vlaneseq
      %v684 = vshrl.u32 %v683, 7
      %v685 = vsub.s32 %v603, %v684
      %v686 = vrot.slane %v514, %v685
      %v687 = vsel %vm608, %v686, %v682
      %v688 = vlaneseq
      %v689 = vshrl.u32 %v688, 7
      %v690 = vsub.s32 %v556, %v689
      %v691 = vrot.slane %v515, %v690
      %v692 = vlaneseq
      %v693 = vshrl.u32 %v692, 7
      %v694 = vsub.s32 %v561, %v693
      %v695 = vrot.slane %v516, %v694
      %v696 = vsel %vm566, %v695, %v691
      %v697 = vlaneseq
      %v698 = vshrl.u32 %v697, 7
      %v699 = vsub.s32 %v568, %v698
      %v700 = vrot.slane %v517, %v699
      %v701 = vsel %vm573, %v700, %v696
      %v702 = vlaneseq
      %v703 = vshrl.u32 %v702, 7
      %v704 = vsub.s32 %v575, %v703
      %v705 = vrot.slane %v518, %v704
      %v706 = vsel %vm580, %v705, %v701
      %v707 = vlaneseq
      %v708 = vshrl.u32 %v707, 7
      %v709 = vsub.s32 %v582, %v708
      %v710 = vrot.slane %v519, %v709
      %v711 = vsel %vm587, %v710, %v706
      %v712 = vlaneseq
      %v713 = vshrl.u32 %v712, 7
      %v714 = vsub.s32 %v589, %v713
      %v715 = vrot.slane %v520, %v714
      %v716 = vsel %vm594, %v715, %v711
      %v717 = vlaneseq
      %v718 = vshrl.u32 %v717, 7
      %v719 = vsub.s32 %v596, %v718
      %v720 = vrot.slane %v521, %v719
      %v721 = vsel %vm601, %v720, %v716
      %v722 = vlaneseq
      %v723 = vshrl.u32 %v722, 7
      %v724 = vsub.s32 %v603, %v723
      %v725 = vrot.slane %v522, %v724
      %v726 = vsel %vm608, %v725, %v721
      %vm727 = vcmask 1041409
      %v728 = vsel %vm727, %v648, %v609
      %vm729 = vcmask 1042434
      %v730 = vsel %vm729, %v687, %v728
      %vm731 = vcmask 1043459
      %v732 = vsel %vm731, %v726, %v730
      %vm734 = vcmask 519168
      %735 = vst.msk [vmem:[%s328] sm:$0xf] %vm734, %v732
      %v736 = vpack.c.bf16 %v492, %v491
      %v737 = vpack.c.bf16 %v494, %v493
      %v738 = vpack.c.bf16 %v496, %v495
      %v739 = vpack.c.bf16 %v498, %v497
      %v740 = vpack.c.bf16 %v500, %v499
      %v741 = vpack.c.bf16 %v502, %v501
      %v742 = vpack.c.bf16 %v504, %v503
      %v743 = vpack.c.bf16 %v506, %v505
      %v744 = vpack.c.bf16 %v508, %v507
      %v745 = vpack.c.bf16 %v510, %v509
      %v746 = vpack.c.bf16 %v512, %v511
      %v747 = vpack.c.bf16 %v514, %v513
      %v748 = vpack.c.bf16 %v516, %v515
      %v749 = vpack.c.bf16 %v518, %v517
      %v750 = vpack.c.bf16 %v520, %v519
      %v751 = vpack.c.bf16 %v522, %v521
      %v752 = vld [vmem:[%s309] sm:$0xf]
      %v753 = vld [vmem:[%s309 + $0x4] sm:$0xf]
      %v754 = vld [vmem:[%s309 + $0x8] sm:$0xf]
      %v755 = vld [vmem:[%s309 + $0xc] sm:$0xf]
      %v772 = vunpack.c.l.b16 %v736
      %v773 = vunpack.c.h.b16 %v736
      %v774 = vunpack.c.l.b16 %v737
      %v775 = vunpack.c.h.b16 %v737
      %v776 = vunpack.c.l.b16 %v738
      %v777 = vunpack.c.h.b16 %v738
      %v778 = vunpack.c.l.b16 %v739
      %v779 = vunpack.c.h.b16 %v739
      %v780 = vunpack.c.l.b16 %v740
      %v781 = vunpack.c.h.b16 %v740
      %v782 = vunpack.c.l.b16 %v741
      %v783 = vunpack.c.h.b16 %v741
      %v784 = vunpack.c.l.b16 %v742
      %v785 = vunpack.c.h.b16 %v742
      %v786 = vunpack.c.l.b16 %v743
      %v787 = vunpack.c.h.b16 %v743
      %v788 = vunpack.c.l.b16 %v744
      %v789 = vunpack.c.h.b16 %v744
      %v790 = vunpack.c.l.b16 %v745
      %v791 = vunpack.c.h.b16 %v745
      %v792 = vunpack.c.l.b16 %v746
      %v793 = vunpack.c.h.b16 %v746
      %v794 = vunpack.c.l.b16 %v747
      %v795 = vunpack.c.h.b16 %v747
      %v796 = vunpack.c.l.b16 %v748
      %v797 = vunpack.c.h.b16 %v748
      %v798 = vunpack.c.l.b16 %v749
      %v799 = vunpack.c.h.b16 %v749
      %v800 = vunpack.c.l.b16 %v750
      %v801 = vunpack.c.h.b16 %v750
      %v802 = vunpack.c.l.b16 %v751
      %v803 = vunpack.c.h.b16 %v751
      %v804 = vlaneseq
      %v805 = vshrl.u32 %v804, 7
      %v806 = vsub.s32 %v556, %v805
      %v807 = vrot.slane %v772, %v806
      %v808 = vlaneseq
      %v809 = vshrl.u32 %v808, 7
      %v810 = vsub.s32 %v561, %v809
      %v811 = vrot.slane %v773, %v810
      %v812 = vsel %vm566, %v811, %v807
      %v813 = vlaneseq
      %v814 = vshrl.u32 %v813, 7
      %v815 = vsub.s32 %v568, %v814
      %v816 = vrot.slane %v774, %v815
      %v817 = vsel %vm573, %v816, %v812
      %v818 = vlaneseq
      %v819 = vshrl.u32 %v818, 7
      %v820 = vsub.s32 %v575, %v819
      %v821 = vrot.slane %v775, %v820
      %v822 = vsel %vm580, %v821, %v817
      %v823 = vlaneseq
      %v824 = vshrl.u32 %v823, 7
      %v825 = vsub.s32 %v582, %v824
      %v826 = vrot.slane %v776, %v825
      %v827 = vsel %vm587, %v826, %v822
      %v828 = vlaneseq
      %v829 = vshrl.u32 %v828, 7
      %v830 = vsub.s32 %v589, %v829
      %v831 = vrot.slane %v777, %v830
      %v832 = vsel %vm594, %v831, %v827
      %v833 = vlaneseq
      %v834 = vshrl.u32 %v833, 7
      %v835 = vsub.s32 %v596, %v834
      %v836 = vrot.slane %v778, %v835
      %v837 = vsel %vm601, %v836, %v832
      %v838 = vlaneseq
      %v839 = vshrl.u32 %v838, 7
      %v840 = vsub.s32 %v603, %v839
      %v841 = vrot.slane %v779, %v840
      %v842 = vsel %vm608, %v841, %v837
      %v843 = vlaneseq
      %v844 = vshrl.u32 %v843, 7
      %v845 = vsub.s32 %v556, %v844
      %v846 = vrot.slane %v780, %v845
      %v847 = vlaneseq
      %v848 = vshrl.u32 %v847, 7
      %v849 = vsub.s32 %v561, %v848
      %v850 = vrot.slane %v781, %v849
      %v851 = vsel %vm566, %v850, %v846
      %v852 = vlaneseq
      %v853 = vshrl.u32 %v852, 7
      %v854 = vsub.s32 %v568, %v853
      %v855 = vrot.slane %v782, %v854
      %v856 = vsel %vm573, %v855, %v851
      %v857 = vlaneseq
      %v858 = vshrl.u32 %v857, 7
      %v859 = vsub.s32 %v575, %v858
      %v860 = vrot.slane %v783, %v859
      %v861 = vsel %vm580, %v860, %v856
      %v862 = vlaneseq
      %v863 = vshrl.u32 %v862, 7
      %v864 = vsub.s32 %v582, %v863
      %v865 = vrot.slane %v784, %v864
      %v866 = vsel %vm587, %v865, %v861
      %v867 = vlaneseq
      %v868 = vshrl.u32 %v867, 7
      %v869 = vsub.s32 %v589, %v868
      %v870 = vrot.slane %v785, %v869
      %v871 = vsel %vm594, %v870, %v866
      %v872 = vlaneseq
      %v873 = vshrl.u32 %v872, 7
      %v874 = vsub.s32 %v596, %v873
      %v875 = vrot.slane %v786, %v874
      %v876 = vsel %vm601, %v875, %v871
      %v877 = vlaneseq
      %v878 = vshrl.u32 %v877, 7
      %v879 = vsub.s32 %v603, %v878
      %v880 = vrot.slane %v787, %v879
      %v881 = vsel %vm608, %v880, %v876
      %v882 = vlaneseq
      %v883 = vshrl.u32 %v882, 7
      %v884 = vsub.s32 %v556, %v883
      %v885 = vrot.slane %v788, %v884
      %v886 = vlaneseq
      %v887 = vshrl.u32 %v886, 7
      %v888 = vsub.s32 %v561, %v887
      %v889 = vrot.slane %v789, %v888
      %v890 = vsel %vm566, %v889, %v885
      %v891 = vlaneseq
      %v892 = vshrl.u32 %v891, 7
      %v893 = vsub.s32 %v568, %v892
      %v894 = vrot.slane %v790, %v893
      %v895 = vsel %vm573, %v894, %v890
      %v896 = vlaneseq
      %v897 = vshrl.u32 %v896, 7
      %v898 = vsub.s32 %v575, %v897
      %v899 = vrot.slane %v791, %v898
      %v900 = vsel %vm580, %v899, %v895
      %v901 = vlaneseq
      %v902 = vshrl.u32 %v901, 7
      %v903 = vsub.s32 %v582, %v902
      %v904 = vrot.slane %v792, %v903
      %v905 = vsel %vm587, %v904, %v900
      %v906 = vlaneseq
      %v907 = vshrl.u32 %v906, 7
      %v908 = vsub.s32 %v589, %v907
      %v909 = vrot.slane %v793, %v908
      %v910 = vsel %vm594, %v909, %v905
      %v911 = vlaneseq
      %v912 = vshrl.u32 %v911, 7
      %v913 = vsub.s32 %v596, %v912
      %v914 = vrot.slane %v794, %v913
      %v915 = vsel %vm601, %v914, %v910
      %v916 = vlaneseq
      %v917 = vshrl.u32 %v916, 7
      %v918 = vsub.s32 %v603, %v917
      %v919 = vrot.slane %v795, %v918
      %v920 = vsel %vm608, %v919, %v915
      %v921 = vlaneseq
      %v922 = vshrl.u32 %v921, 7
      %v923 = vsub.s32 %v556, %v922
      %v924 = vrot.slane %v796, %v923
      %v925 = vlaneseq
      %v926 = vshrl.u32 %v925, 7
      %v927 = vsub.s32 %v561, %v926
      %v928 = vrot.slane %v797, %v927
      %v929 = vsel %vm566, %v928, %v924
      %v930 = vlaneseq
      %v931 = vshrl.u32 %v930, 7
      %v932 = vsub.s32 %v568, %v931
      %v933 = vrot.slane %v798, %v932
      %v934 = vsel %vm573, %v933, %v929
      %v935 = vlaneseq
      %v936 = vshrl.u32 %v935, 7
      %v937 = vsub.s32 %v575, %v936
      %v938 = vrot.slane %v799, %v937
      %v939 = vsel %vm580, %v938, %v934
      %v940 = vlaneseq
      %v941 = vshrl.u32 %v940, 7
      %v942 = vsub.s32 %v582, %v941
      %v943 = vrot.slane %v800, %v942
      %v944 = vsel %vm587, %v943, %v939
      %v945 = vlaneseq
      %v946 = vshrl.u32 %v945, 7
      %v947 = vsub.s32 %v589, %v946
      %v948 = vrot.slane %v801, %v947
      %v949 = vsel %vm594, %v948, %v944
      %v950 = vlaneseq
      %v951 = vshrl.u32 %v950, 7
      %v952 = vsub.s32 %v596, %v951
      %v953 = vrot.slane %v802, %v952
      %v954 = vsel %vm601, %v953, %v949
      %v955 = vlaneseq
      %v956 = vshrl.u32 %v955, 7
      %v957 = vsub.s32 %v603, %v956
      %v958 = vrot.slane %v803, %v957
      %v959 = vsel %vm608, %v958, %v954
      %v960 = vsel %vm727, %v881, %v842
      %v961 = vsel %vm729, %v920, %v960
      %v962 = vsel %vm731, %v959, %v961
      %v963 = vpack.c.b16 %v962, %v962
      %v968 = vunpack.c.l.b16 %v752
      %v969 = vunpack.c.l.b16 %v753
      %v970 = vunpack.c.l.b16 %v754
      %v971 = vunpack.c.l.b16 %v755
      %v972 = vpack.c.b16 %v969, %v968
      %v973 = vpack.c.b16 %v971, %v970
      %v975 = vsel %vm394, %v963, 0
      %v978 = vsel %vm394, %v972, 0
      %v981 = vsel %vm394, %v973, 0
      %983 = vmatprep.subr.bf16.mxu0 0
      %984 = vmatpush1.bf16.xpose.msra.mxu0 %v978
      %985 = vmatprep.subr.bf16.mxu0 0
      %986 = vmatpush1.bf16.xpose.msra.mxu0 %v981
      %987 = vmatprep.subr.bf16.mxu0 0
      %988 = vmatpush1.bf16.xpose.msra.mxu0 0
      %989 = vmatprep.subr.bf16.mxu0 0
      %990 = vmatpush1.bf16.xpose.msra.mxu0 0
      %991 = vmatprep.subr.bf16.mxu0 0
      %992 = vmatpush1.bf16.xpose.msra.mxu0 0
      %993 = vmatprep.subr.bf16.mxu0 0
      %994 = vmatpush1.bf16.xpose.msra.mxu0 0
      %995 = vmatprep.subr.bf16.mxu0 0
      %996 = vmatpush1.bf16.xpose.msra.mxu0 0
      %997 = vmatprep.subr.bf16.mxu0 0
      %998 = vmatpush1.bf16.xpose.msra.mxu0 0
      %999 = vmatprep.subr.bf16.mxu0 0
      %1000 = vmatpush1.bf16.xpose.msra.mxu0 0
      %1001 = vmatprep.subr.bf16.mxu0 0
      %1002 = vmatpush1.bf16.xpose.msra.mxu0 0
      %1003 = vmatprep.subr.bf16.mxu0 0
      %1004 = vmatpush1.bf16.xpose.msra.mxu0 0
      %1005 = vmatprep.subr.bf16.mxu0 0
      %1006 = vmatpush1.bf16.xpose.msra.mxu0 0
      %1007 = vmatprep.subr.bf16.mxu0 0
      %1008 = vmatpush1.bf16.xpose.msra.mxu0 0
      %1009 = vmatprep.subr.bf16.mxu0 0
      %1010 = vmatpush1.bf16.xpose.msra.mxu0 0
      %1011 = vmatprep.subr.bf16.mxu0 0
      %1012 = vmatpush1.bf16.xpose.msra.mxu0 0
      %1013 = vmatprep.subr.bf16.mxu0 0
      %1014 = vmatpush1.bf16.xpose.msra.mxu0 0
      %1015 = vmatprep.mubr.bf16.mxu0 0
      %1016 = vmatmul.mubr.bf16.gmra.mrb[0].mxu0 %v975
      %v1017 = vpop.f32.mrb[0].mxu0
      %v1018 = vadd.f32 0.0, %v1017
      %v1019 = vpop.f32.mrb[0].mxu0
      %v1020 = vpop.f32.mrb[0].mxu0
      %v1021 = vpop.f32.mrb[0].mxu0
      %1022 = vdwg.mxu0
      %vm1023 = vcmask 257024
      %v1024 = vsel %vm1023, %v1018, 0.0
      %v1025 = vrot.slane %v1024, 4
      %v1026 = vadd.f32 %v1024, %v1025
      %v1027 = vrot.slane %v1026, 2
      %v1028 = vadd.f32 %v1026, %v1027
      %v1029 = vrot.slane %v1028, 1
      %v1030 = vadd.f32 %v1028, %v1029
      %v1031 = vrcp.pop 4.0
      %v1032 = vmul.f32 %v1030, %v1031
      %v1033 = vsub.f32 %v1018, %v1032
      %v1034 = vmul.f32 %v1033, %v1033
      %v1035 = vsel %vm1023, %v1034, 0.0
      %v1036 = vrot.slane %v1035, 4
      %v1037 = vadd.f32 %v1035, %v1036
      %v1038 = vrot.slane %v1037, 2
      %v1039 = vadd.f32 %v1037, %v1038
      %v1040 = vrot.slane %v1039, 1
      %v1041 = vadd.f32 %v1039, %v1040
      %v1042 = vmul.f32 %v1041, %v1031
      %v1043 = vadd.f32 %v1042, 1e-05
      %v1044 = vrsqrt.pop %v1043
      %v1045 = vmul.f32 %v1033, %v1044
      %v1046 = vld [vmem:[%s312] sm:$0x1]
      %v1048 = vlaneseq
      %v1049 = vshrl.u32 %v1048, 7
      %v1050 = vsub.s32 0, %v1049
      %v1051 = vrot.slane %v1046, %v1050
      %v1053 = vmul.f32 %v1045, %v1051
      %v1054 = vld [vmem:[%s315] sm:$0x1]
      %v1056 = vlaneseq
      %v1057 = vshrl.u32 %v1056, 7
      %v1058 = vsub.s32 0, %v1057
      %v1059 = vrot.slane %v1054, %v1058
      %v1061 = vadd.f32 %v1053, %v1059
      %v1062 = vpack.c.bf16 %v1061, %v1061
      %v1063 = vld [vmem:[%s320] sm:$0xf]
      %v1064 = vld [vmem:[%s320 + $0x4] sm:$0xf]
      %v1067 = vunpack.c.l.b16 %v1063
      %v1068 = vunpack.c.l.b16 %v1064
      %v1069 = vpack.c.b16 %v1068, %v1067
      %vm1070 = vcmask 261120
      %v1072 = vsel %vm1070, %v1062, 0
      %v1075 = vsel %vm1070, %v1069, 0
      %1077 = vmatprep.subr.bf16.mxu0 0
      %1078 = vmatpush1.bf16.xpose.msra.mxu0 %v1075
      %1079 = vmatprep.subr.bf16.mxu0 0
      %1080 = vmatpush1.bf16.xpose.msra.mxu0 0
      %1081 = vmatprep.subr.bf16.mxu0 0
      %1082 = vmatpush1.bf16.xpose.msra.mxu0 0
      %1083 = vmatprep.subr.bf16.mxu0 0
      %1084 = vmatpush1.bf16.xpose.msra.mxu0 0
      %1085 = vmatprep.subr.bf16.mxu0 0
      %1086 = vmatpush1.bf16.xpose.msra.mxu0 0
      %1087 = vmatprep.subr.bf16.mxu0 0
      %1088 = vmatpush1.bf16.xpose.msra.mxu0 0
      %1089 = vmatprep.subr.bf16.mxu0 0
      %1090 = vmatpush1.bf16.xpose.msra.mxu0 0
      %1091 = vmatprep.subr.bf16.mxu0 0
      %1092 = vmatpush1.bf16.xpose.msra.mxu0 0
      %1093 = vmatprep.subr.bf16.mxu0 0
      %1094 = vmatpush1.bf16.xpose.msra.mxu0 0
      %1095 = vmatprep.subr.bf16.mxu0 0
      %1096 = vmatpush1.bf16.xpose.msra.mxu0 0
      %1097 = vmatprep.subr.bf16.mxu0 0
      %1098 = vmatpush1.bf16.xpose.msra.mxu0 0
      %1099 = vmatprep.subr.bf16.mxu0 0
      %1100 = vmatpush1.bf16.xpose.msra.mxu0 0
      %1101 = vmatprep.subr.bf16.mxu0 0
      %1102 = vmatpush1.bf16.xpose.msra.mxu0 0
      %1103 = vmatprep.subr.bf16.mxu0 0
      %1104 = vmatpush1.bf16.xpose.msra.mxu0 0
      %1105 = vmatprep.subr.bf16.mxu0 0
      %1106 = vmatpush1.bf16.xpose.msra.mxu0 0
      %1107 = vmatprep.subr.bf16.mxu0 0
      %1108 = vmatpush1.bf16.xpose.msra.mxu0 0
      %1109 = vmatprep.mubr.bf16.mxu0 0
      %1110 = vmatmul.mubr.bf16.gmra.mrb[0].mxu0 %v1072
      %v1111 = vpop.f32.mrb[0].mxu0
      %v1112 = vadd.f32 0.0, %v1111
      %v1113 = vpop.f32.mrb[0].mxu0
      %v1114 = vpop.f32.mrb[0].mxu0
      %v1115 = vpop.f32.mrb[0].mxu0
      %1116 = vdwg.mxu0
      %vm1117 = vcmask 125952
      %1118 = vst.msk [vmem:[%s324] sm:$0xf] %vm1117, %v1112
      %p1119 = scmp.lt.s32.totalorder %s18, 1
      %s1120 = scalar_select %p1119, %s18, 1
      %s1121 = smul.addr %s1120, 4
      %s1122 = scalar_lea.vmem %s5, %s1121
      %p1123 = scmp.lt.s32.totalorder %s18, 1
      %s1124 = scalar_select %p1123, %s18, 1
      %s1125 = smul.addr %s1124, 4
      %s1126 = scalar_lea.vmem %s6, %s1125
      // Predicated region
      $region41: #{multihead_forward.1} parent=39 // pred_check
        %p1127 = pneg %p166
      $region42: #{multihead_forward.1} parent=39 // pred_check_branch
        %1129 = sbr.rel (%p1127) target = $region44
      $region43: #{multihead_forward.1} parent=39 // pred_region
        _
      $region44: #{multihead_forward.1} parent=39 // pred_fallthru
        _
      // Predicated region
      $region45: #{multihead_forward.1} parent=39 // pred_check
        %p1130 = pneg %p192
      $region46: #{multihead_forward.1} parent=39 // pred_check_branch
        %1132 = sbr.rel (%p1130) target = $region48
      $region47: #{multihead_forward.1} parent=39 // pred_region
        _
      $region48: #{multihead_forward.1} parent=39 // pred_fallthru
        _
    $region40: #{multihead_forward.1} parent=5 // pred_fallthru
      _
    %p1133 = scmp.le.s32.totalorder 2, %s13
    // Predicated region
    $region49: #{multihead_forward.1} parent=5 // pred_check
      %p1134 = pneg %p1133
    $region50: #{multihead_forward.1} parent=5 // pred_check_branch
      %1136 = sbr.rel (%p1134) target = $region52
    $region51: #{multihead_forward.1} parent=5 // pred_region
      %s1137 = ssub.s32 %s13, 2
      // Predicated region
      $region53: #{multihead_forward.1} parent=51 // pred_check
        %p1138 = pneg %p172
      $region54: #{multihead_forward.1} parent=51 // pred_check_branch
        %1140 = sbr.rel (%p1138) target = $region56
      $region55: #{multihead_forward.1} parent=51 // pred_region
        %p1141 = scmp.lt.s32.totalorder %s19, 1
        %s1142 = scalar_select %p1141, %s19, 1
        %s1143 = smul.addr %s1142, 4
        %s1144 = scalar_lea.vmem %s5, %s1143
      $region56: #{multihead_forward.1} parent=51 // pred_fallthru
        _
      // Predicated region
      $region57: #{multihead_forward.1} parent=51 // pred_check
        %p1145 = pneg %p198
      $region58: #{multihead_forward.1} parent=51 // pred_check_branch
        %1147 = sbr.rel (%p1145) target = $region60
      $region59: #{multihead_forward.1} parent=51 // pred_region
        %p1148 = scmp.lt.s32.totalorder %s19, 1
        %s1149 = scalar_select %p1148, %s19, 1
        %s1150 = smul.addr %s1149, 4
        %s1151 = scalar_lea.vmem %s6, %s1150
      $region60: #{multihead_forward.1} parent=51 // pred_fallthru
        _
    $region52: #{multihead_forward.1} parent=5 // pred_fallthru
      _
  $region6: #{multihead_forward.1} parent=0 // loop_footer
    %s17 = sadd.s32 1, %s13
  $region7: #{multihead_forward.1} parent=0 // loop_footer_branch
    %12 = sbr.rel target = $region3
  $region8: #{multihead_forward.1} parent=0 // loop_exit
    _

</llo_original>
